<compile_context>
chip_gen: v6e
topology: v6e:2x2x1
jax: 0.10.0
libtpu: 0.0.40
codegen_flags: <defaults>
</compile_context>

<pallas_src>
import functools

import jax
import jax.numpy as jnp
from jax.experimental import pallas as pl
from jax.experimental.pallas import tpu as pltpu

_NEG_INF = -1e30                  # finite "minus infinity"; kept in f32, never bf16
_VMEM_LIMIT = 48 * 1024 * 1024    # explicit, < 64 MiB physical VMEM on v7x


def _fit(dim, target):
    """Largest tile <= target that divides dim (halving search), else full dim."""
    if dim <= target:
        return dim
    t = target
    while t >= 8:
        if dim % t == 0:
            return t
        t //= 2
    return dim


# ----------------------------------------------------------------------------
# Tiled projection matmul
# ----------------------------------------------------------------------------
def _matmul_kernel(x_ref, w_ref, o_ref, acc_ref):
    @pl.when(pl.program_id(2) == 0)
    def _init():
        acc_ref[...] = jnp.zeros_like(acc_ref)

    acc_ref[...] += jnp.dot(x_ref[...], w_ref[...],
                            preferred_element_type=jnp.float32)

    @pl.when(pl.program_id(2) == pl.num_programs(2) - 1)
    def _done():
        o_ref[...] = acc_ref[...].astype(o_ref.dtype)


def linear(x, w, *, block_m=256, block_n=256, block_k=512):
    """x: [M, K] @ w: [K, N] -> [M, N]; bf16 MXU inputs, f32 accumulation."""
    M, K = x.shape
    K2, N = w.shape
    assert K == K2
    tm, tn, tk = _fit(M, block_m), _fit(N, block_n), _fit(K, block_k)
    return pl.pallas_call(
        _matmul_kernel,
        out_shape=jax.ShapeDtypeStruct((M, N), x.dtype),
        grid=(M // tm, N // tn, K // tk),
        in_specs=[
            pl.BlockSpec((tm, tk), lambda i, j, k: (i, k)),
            pl.BlockSpec((tk, tn), lambda i, j, k: (k, j)),
        ],
        out_specs=pl.BlockSpec((tm, tn), lambda i, j, k: (i, j)),
        scratch_shapes=[pltpu.VMEM((tm, tn), jnp.float32)],
        compiler_params=pltpu.CompilerParams(
            dimension_semantics=("parallel", "parallel", "arbitrary"),
            vmem_limit_bytes=_VMEM_LIMIT),
    )(x, w)


# ----------------------------------------------------------------------------
# Fused neox RoPE over Q and K heads (reads head columns straight from qkv)
# ----------------------------------------------------------------------------
def _rope_kernel(x_ref, cos_ref, sin_ref, o_ref, *, num_q_heads, scaling):
    h = pl.program_id(0)
    x = x_ref[...].astype(jnp.float32)                 # (ts, D)
    half = x.shape[-1] // 2
    rot = pltpu.roll(x, half, 1)                       # [x2, x1] -- XLU slot
    # Query scaling folded into the RoPE pass for Q heads only.
    scale = jnp.where(h < num_q_heads, scaling, 1.0).astype(jnp.float32)
    o_ref[...] = ((x * cos_ref[...] + rot * sin_ref[...]) * scale).astype(o_ref.dtype)


def apply_rope_qk(qkv, cos, sin, *, num_q_heads, num_kv_heads, scaling,
                  block_s=256):
    """qkv: [S, (H + 2*Hkv) * D] token-major (q heads, then k heads, then v).
    cos/sin: [S, D] full-width lane-dense tables (sin already sign-folded as
    [-sin, sin]).  Returns RoPE'd [S, (H + Hkv) * D] with q scaled."""
    S = qkv.shape[0]
    D = cos.shape[1]
    nh = num_q_heads + num_kv_heads
    ts = _fit(S, block_s)
    kernel = functools.partial(_rope_kernel, num_q_heads=num_q_heads,
                               scaling=float(scaling))
    return pl.pallas_call(
        kernel,
        out_shape=jax.ShapeDtypeStruct((S, nh * D), qkv.dtype),
        grid=(nh, S // ts),
        in_specs=[
            pl.BlockSpec((ts, D), lambda h, i: (i, h)),   # q/k head columns of qkv
            pl.BlockSpec((ts, D), lambda h, i: (i, 0)),
            pl.BlockSpec((ts, D), lambda h, i: (i, 0)),
        ],
        out_specs=pl.BlockSpec((ts, D), lambda h, i: (i, h)),
        compiler_params=pltpu.CompilerParams(
            dimension_semantics=("parallel", "parallel"),
            vmem_limit_bytes=_VMEM_LIMIT),
    )(qkv, cos, sin)


# ----------------------------------------------------------------------------
# Flash-style causal GQA attention (online softmax + causal block skipping)
# ----------------------------------------------------------------------------
def _flash_kernel(q_ref, k_ref, v_ref, o_ref, m_sc, l_sc, acc_sc, *, tq, tk):
    qi = pl.program_id(1)
    ki = pl.program_id(2)

    @pl.when(ki == 0)
    def _init():
        m_sc[...] = jnp.full_like(m_sc, _NEG_INF)
        l_sc[...] = jnp.zeros_like(l_sc)
        acc_sc[...] = jnp.zeros_like(acc_sc)

    def _update(s):
        m_prev = m_sc[...]
        m_new = jnp.maximum(m_prev, jnp.max(s, axis=-1, keepdims=True))
        alpha = jnp.exp(m_prev - m_new)                    # (tq, 1) f32
        p = jnp.exp(s - m_new)                             # (tq, tk) f32
        l_sc[...] = alpha * l_sc[...] + jnp.sum(p, axis=-1, keepdims=True)
        acc_sc[...] = alpha * acc_sc[...] + jnp.dot(
            p.astype(v_ref.dtype), v_ref[...], preferred_element_type=jnp.float32)
        m_sc[...] = m_new

    # Skip KV blocks that lie entirely above the causal diagonal.
    run = ki * tk < (qi + 1) * tq
    # Only blocks that intersect the diagonal need the causal mask.
    on_diag = ki * tk + tk - 1 > qi * tq

    @pl.when(run)
    def _run():
        q = q_ref[...]          # (tq, D) bf16 -- RoPE + scaling already applied
        k = k_ref[...]          # (tk, D) bf16 -- RoPE already applied
        # QK^T on the MXU (contract on head dim), f32 accumulation.
        s = jax.lax.dot_general(q, k, (((1,), (1,)), ((), ())),
                                preferred_element_type=jnp.float32)   # (tq, tk)

        @pl.when(on_diag)
        def _diag_block():
            row = qi * tq + jax.lax.broadcasted_iota(jnp.int32, (tq, tk), 0)
            col = ki * tk + jax.lax.broadcasted_iota(jnp.int32, (tq, tk), 1)
            _update(jnp.where(col <= row, s, _NEG_INF))    # mask stays in f32

        @pl.when(jnp.logical_not(on_diag))
        def _full_block():
            _update(s)

    @pl.when(ki == pl.num_programs(2) - 1)
    def _finalize():
        inv_l = pl.reciprocal(l_sc[...], approx=True)      # EUP slot, ~free
        o_ref[...] = (acc_sc[...] * inv_l).astype(o_ref.dtype)


def causal_flash_attention(qk, qkv, *, num_heads, num_kv_heads, head_dim,
                           block_q=128, block_kv=128):
    """Token-major flash attention over fused buffers.
    qk:  [S, (H + Hkv) * D]  (RoPE'd q heads then k heads, q pre-scaled)
    qkv: [S, (H + 2*Hkv) * D] (v heads read from columns H + Hkv ...)
    Returns [S, H * D]."""
    S = qk.shape[0]
    H, Hkv, D = num_heads, num_kv_heads, head_dim
    group = H // Hkv
    tq, tk = _fit(S, block_q), _fit(S, block_kv)
    kernel = functools.partial(_flash_kernel, tq=tq, tk=tk)

    def q_map(h, qi, ki):
        return (qi, h)

    def kv_col_clamp(qi, ki):
        # Clamp KV block index above the causal diagonal so consecutive grid
        # steps see identical indices -> pipeline skips the redundant DMA.
        last = ((qi + 1) * tq - 1) // tk
        return jnp.minimum(ki, last)

    def k_map(h, qi, ki):
        return (kv_col_clamp(qi, ki), H + h // group)

    def v_map(h, qi, ki):
        return (kv_col_clamp(qi, ki), H + Hkv + h // group)

    return pl.pallas_call(
        kernel,
        out_shape=jax.ShapeDtypeStruct((S, H * D), qk.dtype),
        grid=(H, S // tq, S // tk),
        in_specs=[
            pl.BlockSpec((tq, D), q_map),   # q from fused RoPE output
            pl.BlockSpec((tk, D), k_map),   # k from fused RoPE output
            pl.BlockSpec((tk, D), v_map),   # v straight out of qkv (no HBM slice)
        ],
        out_specs=pl.BlockSpec((tq, D), q_map),
        scratch_shapes=[
            pltpu.VMEM((tq, 1), jnp.float32),   # running max   (f32)
            pltpu.VMEM((tq, 1), jnp.float32),   # running denom (f32)
            pltpu.VMEM((tq, D), jnp.float32),   # output accumulator (f32)
        ],
        compiler_params=pltpu.CompilerParams(
            dimension_semantics=("parallel", "parallel", "arbitrary"),
            vmem_limit_bytes=_VMEM_LIMIT),
    )(qk, qk, qkv)


# ----------------------------------------------------------------------------
# Module wrapper (parameters + glue)
# ----------------------------------------------------------------------------
class LlamaAttentionPallas:
    def __init__(self, hidden_size, num_heads, num_kv_heads,
                 rope_theta=10000.0, max_position_embeddings=8192,
                 dtype=jnp.bfloat16, attn_block_q=128, attn_block_kv=128,
                 lin_block_m=256, lin_block_n=256, lin_block_k=512, key=None):
        assert num_heads % num_kv_heads == 0
        self.hidden_size = hidden_size
        self.num_heads = num_heads
        self.num_kv_heads = num_kv_heads
        self.head_dim = hidden_size // num_heads
        self.q_size = num_heads * self.head_dim
        self.kv_size = num_kv_heads * self.head_dim
        self.scaling = self.head_dim ** -0.5
        self.rope_theta = rope_theta
        self.dtype = dtype
        self.attn_block_q = attn_block_q
        self.attn_block_kv = attn_block_kv
        self.lin_blocks = (lin_block_m, lin_block_n, lin_block_k)

        k1, k2 = jax.random.split(key, 2)
        qkv_out = self.q_size + 2 * self.kv_size
        # weights stored [in, out] in bf16 so the MXU gets bf16 operands
        self.w_qkv = (jax.random.normal(k1, (hidden_size, qkv_out), jnp.float32)
                      * 0.02).astype(dtype)
        self.w_o = (jax.random.normal(k2, (self.q_size, hidden_size), jnp.float32)
                    * 0.02).astype(dtype)

    def _rope_tables(self, positions):
        """Full-width, lane-dense [S, D] cos / sign-folded sin tables (f32)."""
        half = self.head_dim // 2
        inv_freq = 1.0 / (self.rope_theta ** (
            jnp.arange(half, dtype=jnp.float32) * 2.0 / self.head_dim))
        ang = positions.astype(jnp.float32)[:, None] * inv_freq[None, :]  # [S, half]
        c, s = jnp.cos(ang), jnp.sin(ang)
        cos_full = jnp.concatenate([c, c], axis=-1)      # [S, D]
        sin_full = jnp.concatenate([-s, s], axis=-1)     # sign folded for roll form
        return cos_full, sin_full

    def __call__(self, positions, hidden_states, kv_cache=None, input_metadata=None):
        H, Hkv, D = self.num_heads, self.num_kv_heads, self.head_dim
        bm, bn, bk = self.lin_blocks
        x = hidden_states.astype(self.dtype)

        qkv = linear(x, self.w_qkv, block_m=bm, block_n=bn, block_k=bk)  # [S, q+2kv]

        cos, sin = self._rope_tables(positions)
        # RoPE once per q and kv head in a single fused call; query scaling
        # folded in.  Reads head columns directly from qkv (no slice copies).
        qk = apply_rope_qk(qkv, cos, sin, num_q_heads=H, num_kv_heads=Hkv,
                           scaling=self.scaling)                         # [S,(H+Hkv)D]

        attn = causal_flash_attention(
            qk, qkv, num_heads=H, num_kv_heads=Hkv, head_dim=D,
            block_q=self.attn_block_q, block_kv=self.attn_block_kv)      # [S, H*D]

        return linear(attn, self.w_o, block_m=bm, block_n=bn, block_k=bk)


# ----------------------------------------------------------------------------
# Pure-JAX reference (mirrors the kernel's bf16 cast points)
# ----------------------------------------------------------------------------
def reference(module, positions, hidden_states):
    S = hidden_states.shape[0]
    H, Hkv, D = module.num_heads, module.num_kv_heads, module.head_dim
    dt = module.dtype
    x = hidden_states.astype(dt)
    qkv = jnp.dot(x, module.w_qkv, preferred_element_type=jnp.float32).astype(dt)
    q = qkv[:, : module.q_size]
    k = qkv[:, module.q_size: module.q_size + module.kv_size]
    v = qkv[:, module.q_size + module.kv_size:]
    cos, sin = module._rope_tables(positions)            # [S, D] (sin sign-folded)

    def rope(x2d, nheads, scale):
        xf = x2d.reshape(S, nheads, D).astype(jnp.float32)
        rot = jnp.roll(xf, D // 2, axis=-1)
        return ((xf * cos[:, None, :] + rot * sin[:, None, :]) * scale).astype(dt)

    qh = rope(q, H, module.scaling).transpose(1, 0, 2).astype(jnp.float32)   # [H,S,D]
    kh = rope(k, Hkv, 1.0).transpose(1, 0, 2).astype(jnp.float32)            # [Hkv,S,D]
    vh = v.reshape(S, Hkv, D).transpose(1, 0, 2).astype(jnp.float32)
    kh = jnp.repeat(kh, H // Hkv, axis=0)
    vh = jnp.repeat(vh, H // Hkv, axis=0)

    s = jnp.einsum("hqd,hkd->hqk", qh, kh)
    mask = jnp.tril(jnp.ones((S, S), bool))
    s = jnp.where(mask[None], s, _NEG_INF)
    p = jax.nn.softmax(s, axis=-1)
    p = p.astype(dt).astype(jnp.float32)                 # kernel runs PV in bf16
    o = jnp.einsum("hqk,hkd->hqd", p, vh)
    o = o.transpose(1, 0, 2).reshape(S, H * D).astype(dt)
    return jnp.dot(o, module.w_o, preferred_element_type=jnp.float32).astype(dt)


if __name__ == "__main__":
    key = jax.random.PRNGKey(0)
    k_w, k_x = jax.random.split(key)

    # small but kernel-realistic: head_dim = 128 (lane-dense), GQA group = 2
    hidden_size, num_heads, num_kv_heads, seq = 256, 2, 1, 32
    module = LlamaAttentionPallas(
        hidden_size, num_heads, num_kv_heads,
        # tiny blocks so toy shapes exercise the K-accumulation loop and the
        # multi-block flash / causal-block-skip / KV-clamp paths
        attn_block_q=8, attn_block_kv=8, lin_block_k=128,
        key=k_w)

    hidden_states = jax.random.normal(k_x, (seq, hidden_size), jnp.float32)
    positions = jnp.arange(seq, dtype=jnp.int32)

    out = module(positions, hidden_states, kv_cache=None, input_metadata=None)
    out = jax.block_until_ready(out)

    ref = reference(module, positions, hidden_states)
    assert out.shape == (seq, hidden_size)
    err = jnp.max(jnp.abs(out.astype(jnp.float32) - ref.astype(jnp.float32)))
    assert jnp.allclose(out.astype(jnp.float32), ref.astype(jnp.float32),
                        atol=2e-2, rtol=2e-2), f"mismatch vs reference (max err {err})"

    print("KERNEL_OK")
</pallas_src>

<mosaic_0001>
module attributes {stable_mosaic.version = 11 : i64} {
  func.func @_matmul_kernel(%arg0: i32, %arg1: i32, %arg2: i32, %arg3: memref<32x128xbf16, #tpu.memory_space<vmem>>, %arg4: memref<128x256xbf16, #tpu.memory_space<vmem>>, %arg5: memref<32x256xbf16, #tpu.memory_space<vmem>>, %arg6: memref<32x256xf32, #tpu.memory_space<vmem>>) attributes {dimension_semantics = [#tpu.dimension_semantics<parallel>, #tpu.dimension_semantics<parallel>, #tpu.dimension_semantics<arbitrary>], iteration_bounds = array<i64: 1, 2, 2>, scalar_prefetch = 0 : i64, scratch_operands = 1 : i64, tpu.core_type = #tpu.core_type<tc>, window_params = [{transform_indices = @transform_0, window_bounds = array<i64: 32, 128>}, {transform_indices = @transform_1, window_bounds = array<i64: 128, 256>}, {transform_indices = @transform_2, window_bounds = array<i64: 32, 256>}]} {
    %c0_i32 = arith.constant 0 : i32
    %0 = arith.cmpi eq, %arg2, %c0_i32 : i32
    %1 = arith.extui %0 : i1 to i32
    %c0_i32_0 = arith.constant 0 : i32
    %2 = arith.cmpi ne, %1, %c0_i32_0 : i32
    scf.if %2 {
      %cst_9 = arith.constant 0.000000e+00 : f32
      %12 = vector.broadcast %cst_9 : f32 to vector<32x256xf32>
      %c0_10 = arith.constant 0 : index
      %c0_11 = arith.constant 0 : index
      %13 = vector.load %arg6[%c0_10, %c0_11] : memref<32x256xf32, #tpu.memory_space<vmem>>, vector<32x256xf32>
      tpu.vector_store %arg6[%c0_10, %c0_11], %12 {strides = array<i32>} : memref<32x256xf32, #tpu.memory_space<vmem>>, vector<32x256xf32>,
    } else {
    }
    %c0 = arith.constant 0 : index
    %c0_1 = arith.constant 0 : index
    %3 = vector.load %arg6[%c0, %c0_1] : memref<32x256xf32, #tpu.memory_space<vmem>>, vector<32x256xf32>
    %c0_2 = arith.constant 0 : index
    %c0_3 = arith.constant 0 : index
    %4 = vector.load %arg3[%c0_2, %c0_3] : memref<32x128xbf16, #tpu.memory_space<vmem>>, vector<32x128xbf16>
    %c0_4 = arith.constant 0 : index
    %c0_5 = arith.constant 0 : index
    %5 = vector.load %arg4[%c0_4, %c0_5] : memref<128x256xbf16, #tpu.memory_space<vmem>>, vector<128x256xbf16>
    %cst = arith.constant dense<0.000000e+00> : vector<32x256xf32>
    %6 = tpu.matmul %4, %5, %cst {dimension_numbers = #tpu.dot_dimension_numbers<[1], [0], [0], [1], [0, 0, 1, 1], [], []>} : vector<32x128xbf16>, vector<128x256xbf16>, vector<32x256xf32> -> vector<32x256xf32>
    %7 = arith.addf %3, %6 : vector<32x256xf32>
    %c0_6 = arith.constant 0 : index
    %c0_7 = arith.constant 0 : index
    %8 = vector.load %arg6[%c0_6, %c0_7] : memref<32x256xf32, #tpu.memory_space<vmem>>, vector<32x256xf32>
    tpu.vector_store %arg6[%c0_6, %c0_7], %7 {strides = array<i32>} : memref<32x256xf32, #tpu.memory_space<vmem>>, vector<32x256xf32>,
    %c1_i32 = arith.constant 1 : i32
    %9 = arith.cmpi eq, %arg2, %c1_i32 : i32
    %10 = arith.extui %9 : i1 to i32
    %c0_i32_8 = arith.constant 0 : i32
    %11 = arith.cmpi ne, %10, %c0_i32_8 : i32
    scf.if %11 {
      %c0_9 = arith.constant 0 : index
      %c0_10 = arith.constant 0 : index
      %12 = vector.load %arg6[%c0_9, %c0_10] : memref<32x256xf32, #tpu.memory_space<vmem>>, vector<32x256xf32>
      %13 = arith.truncf %12 : vector<32x256xf32> to vector<32x256xbf16>
      %c0_11 = arith.constant 0 : index
      %c0_12 = arith.constant 0 : index
      %14 = vector.load %arg5[%c0_11, %c0_12] : memref<32x256xbf16, #tpu.memory_space<vmem>>, vector<32x256xbf16>
      tpu.vector_store %arg5[%c0_11, %c0_12], %13 {strides = array<i32>} : memref<32x256xbf16, #tpu.memory_space<vmem>>, vector<32x256xbf16>,
    } else {
    }
    return
  }
  func.func @transform_0(%arg0: i32, %arg1: i32, %arg2: i32) -> (i32, i32) {
    %c0_i32 = arith.constant 0 : i32
    return %arg0, %arg2 : i32, i32
  }
  func.func @transform_1(%arg0: i32, %arg1: i32, %arg2: i32) -> (i32, i32) {
    %c0_i32 = arith.constant 0 : i32
    return %arg2, %arg1 : i32, i32
  }
  func.func @transform_2(%arg0: i32, %arg1: i32, %arg2: i32) -> (i32, i32) {
    %c0_i32 = arith.constant 0 : i32
    return %arg0, %arg1 : i32, i32
  }
}

</mosaic_0001>

<llo_original>
// kernel: tpu_custom_call.1
$region0: #{tpu_custom_call.1}
  #allocation0 [shape = 'u32[]', space=smem, size = 0x4, offset = 0x4, fixed_abs, tag = 'smem constant byte address 0x4 - core index']
  #allocation1 [shape = 'u32[144,128]{1,0:T(1,128)}', space=vmem, size = 0x12000, scoped, tag = 'internal scratch']
  #allocation2 [shape = 'f32[32,256]{1,0:T(8,128)}', space=vmem, size = 0x8000, scoped, tag = 'scratch operand']
  %s0 = inlined_call_operand.hbm [shape: bf16[32,256], index: 0, kind: input, shape index: {}]
  %s1 = inlined_call_operand.hbm [shape: bf16[256,512], index: 1, kind: input, shape index: {}]
  %s2 = inlined_call_operand.hbm [shape: bf16[32,512], index: 2, kind: output, shape index: {}]
  %s3 = sld [smem:[#allocation0]]
  $region57: #{tpu_custom_call.1} parent=0
    _
  %s5 = ssub.s32 1, %s3
  %s6 = scalar_select 0, %s5, %s3
  $region1: #{tpu_custom_call.1} parent=0
    #allocation3 [shape = 'u8[16384]{0}', space=vmem, size = 0x4000, scoped, tag = 'input window, operand 0']
    #allocation4 [shape = 's32[2]{0}', space=sflag, size = 0x8, scoped, tag = 'scoped memory for tpu_custom_call.1']
    #allocation5 [shape = 's32[2]{0}', space=sflag, size = 0x8, scoped, tag = 'scoped memory for tpu_custom_call.1']
    #allocation6 [shape = 'u8[131072]{0}', space=vmem, size = 0x20000, scoped, tag = 'input window, operand 1']
    #allocation7 [shape = 's32[2]{0}', space=sflag, size = 0x8, scoped, tag = 'scoped memory for tpu_custom_call.1']
    #allocation8 [shape = 'u8[32768]{0}', space=vmem, size = 0x8000, scoped, tag = 'output window, operand 0']
    %7 = vsyncpa [#allocation4], 0
    %s8 = scalar_lea.sflag [#allocation4], 1
    %9 = vsyncpa %s8, 0
    %10 = vsyncpa [#allocation7], 0
    %s11 = scalar_lea.sflag [#allocation7], 1
    %12 = vsyncpa %s11, 0
    %13 = vsyncpa [#allocation5], 0
    %s14 = scalar_lea.sflag [#allocation5], 1
    %15 = vsyncpa %s14, 0
    loop: start=0, step=1, limit=6
    $region2: #{tpu_custom_call.1} parent=1 // loop_pre_header
      _
    $region3: #{tpu_custom_call.1} parent=1 // loop_header
      %s17 = sphi 0, %s21
      %p18 = scmp.ge.s32.totalorder %s17, 6
      %s24 = sphi 0, %s43
      %s25 = sphi 0, %s39
      %s26 = sphi 0, %s35
      %s27 = sphi 0, %s24
      %s28 = sphi 0, %s25
      %s29 = sphi 0, %s26
      %s30 = sphi 0, %s27
      %s31 = sphi 0, %s28
      %s32 = sphi 0, %s29
      %s48 = sphi 0, %s50
      %s51 = sphi 0, %s48
      %s52 = sphi 0, %s51
      %s68 = sphi 0, %s52
      %s76 = sphi 0, %s78
      %s79 = sphi 0, %s76
      %s80 = sphi 0, %s79
      %s96 = sphi 0, %s80
      %s104 = sphi 0, %s106
      %s107 = sphi 0, %s104
      %s108 = sphi 0, %s107
      %s124 = sphi 0, %s108
    $region4: #{tpu_custom_call.1} parent=1 // loop_header_branch
      %20 = sbr.rel (%p18) target = $region8
    $region5: #{tpu_custom_call.1} parent=1 // loop_body
      %s22 = ssub.s32 %s17, 1
      %s23 = ssub.s32 %s17, 2
      %s33 = sadd.s32 1, %s26
      %p34 = scmp.ge.s32.totalorder %s33, 2
      %s35 = scalar_select %p34, 0, %s33
      %s36 = sadd.s32 1, %s25
      %s37 = scalar_select %p34, %s36, %s25
      %p38 = scmp.ge.s32.totalorder %s37, 2
      %s39 = scalar_select %p38, 0, %s37
      %s40 = sadd.s32 1, %s24
      %s41 = scalar_select %p38, %s40, %s24
      %p42 = scmp.ge.s32.totalorder %s41, 1
      %s43 = scalar_select %p42, 0, %s41
      %s44 = ssub.s32 %s24, %s43
      %s45 = ssub.s32 %s26, %s35
      %s46 = sor.u32 %s44, %s45
      %p47 = scmp.eq.s32.totalorder %s46, 0
      %s49 = sadd.s32 %s48, 1
      %s50 = scalar_select %p47, %s48, %s49
      %p53 = pneg %p47
      %p54 = scmp.eq.s32.totalorder %s17, 3
      %p55 = por %p53, %p54
      %p56 = scmp.ne.s32.totalorder %s48, %s51
      %p57 = scmp.eq.s32.totalorder %s17, 0
      %p58 = por %p56, %p57
      %p59 = scmp.ne.s32.totalorder %s48, %s51
      %p60 = scmp.eq.s32.totalorder %s22, 3
      %p61 = por %p59, %p60
      %p62 = scmp.ne.s32.totalorder %s51, %s52
      %p63 = scmp.eq.s32.totalorder %s22, 0
      %p64 = por %p62, %p63
      %p65 = scmp.ne.s32.totalorder %s51, %s52
      %p66 = scmp.eq.s32.totalorder %s23, 3
      %p67 = por %p65, %p66
      %p69 = scmp.ne.s32.totalorder %s52, %s68
      %p70 = scmp.eq.s32.totalorder %s23, 0
      %p71 = por %p69, %p70
      %s72 = ssub.s32 %s26, %s35
      %s73 = ssub.s32 %s25, %s39
      %s74 = sor.u32 %s72, %s73
      %p75 = scmp.eq.s32.totalorder %s74, 0
      %s77 = sadd.s32 %s76, 1
      %s78 = scalar_select %p75, %s76, %s77
      %p81 = pneg %p75
      %p82 = scmp.eq.s32.totalorder %s17, 3
      %p83 = por %p81, %p82
      %p84 = scmp.ne.s32.totalorder %s76, %s79
      %p85 = scmp.eq.s32.totalorder %s17, 0
      %p86 = por %p84, %p85
      %p87 = scmp.ne.s32.totalorder %s76, %s79
      %p88 = scmp.eq.s32.totalorder %s22, 3
      %p89 = por %p87, %p88
      %p90 = scmp.ne.s32.totalorder %s79, %s80
      %p91 = scmp.eq.s32.totalorder %s22, 0
      %p92 = por %p90, %p91
      %p93 = scmp.ne.s32.totalorder %s79, %s80
      %p94 = scmp.eq.s32.totalorder %s23, 3
      %p95 = por %p93, %p94
      %p97 = scmp.ne.s32.totalorder %s80, %s96
      %p98 = scmp.eq.s32.totalorder %s23, 0
      %p99 = por %p97, %p98
      %s100 = ssub.s32 %s24, %s43
      %s101 = ssub.s32 %s25, %s39
      %s102 = sor.u32 %s100, %s101
      %p103 = scmp.eq.s32.totalorder %s102, 0
      %s105 = sadd.s32 %s104, 1
      %s106 = scalar_select %p103, %s104, %s105
      %p109 = pneg %p103
      %p110 = scmp.eq.s32.totalorder %s17, 3
      %p111 = por %p109, %p110
      %p112 = scmp.ne.s32.totalorder %s104, %s107
      %p113 = scmp.eq.s32.totalorder %s17, 0
      %p114 = por %p112, %p113
      %p115 = scmp.ne.s32.totalorder %s104, %s107
      %p116 = scmp.eq.s32.totalorder %s22, 3
      %p117 = por %p115, %p116
      %p118 = scmp.ne.s32.totalorder %s107, %s108
      %p119 = scmp.eq.s32.totalorder %s22, 0
      %p120 = por %p118, %p119
      %p121 = scmp.ne.s32.totalorder %s107, %s108
      %p122 = scmp.eq.s32.totalorder %s23, 3
      %p123 = por %p121, %p122
      %p125 = scmp.ne.s32.totalorder %s108, %s124
      %p126 = scmp.eq.s32.totalorder %s23, 0
      %p127 = por %p125, %p126
      %p128 = scmp.le.s32.totalorder 1, %s17
      %p129 = scmp.lt.s32.totalorder %s17, 5
      %p130 = pnand %p128, %p129
      %p131 = pneg %p130
      // Predicated region
      $region9: #{tpu_custom_call.1} parent=5 // pred_check
        _
      $region10: #{tpu_custom_call.1} parent=5 // pred_check_branch
        %133 = sbr.rel (%p130) target = $region12
      $region11: #{tpu_custom_call.1} parent=5 // pred_region
        %s134 = ssub.s32 %s17, 1
      $region12: #{tpu_custom_call.1} parent=5 // pred_fallthru
        _
      %p135 = scmp.lt.s32.totalorder %s17, 4
      // Predicated region
      $region13: #{tpu_custom_call.1} parent=5 // pred_check
        %p136 = pneg %p135
      $region14: #{tpu_custom_call.1} parent=5 // pred_check_branch
        %138 = sbr.rel (%p136) target = $region16
      $region15: #{tpu_custom_call.1} parent=5 // pred_region
        // Predicated region
        $region17: #{tpu_custom_call.1} parent=15 // pred_check
          %p139 = pneg %p58
        $region18: #{tpu_custom_call.1} parent=15 // pred_check_branch
          %141 = sbr.rel (%p139) target = $region20
        $region19: #{tpu_custom_call.1} parent=15 // pred_region
          %s142 = sand.u32 %s48, 1
          %s143 = scalar_lea.sflag [#allocation4], %s142
          %s144 = sand.u32 %s48, 1
          %s145 = smul.addr %s144, 16
          %s146 = scalar_lea.vmem [#allocation3], %s145
          %s147 = smul.u32 4, %s24
          %s149 = ssub.s32 256, 256
          %150 = vsyncadd %s143, %s149
          %s151 = smul.addr %s147, 2
          %s152 = sadd.s32 %s26, %s151
          %s153 = smul.addr %s152, 64
          %s154 = scalar_lea.hbm %s0, %s153
          %s155 = sshll.u32 %s146, 4
          %s156 = int_to_ptr.vmem [resolvable:$true] %s155
          %161 = dma.hbm_to_vmem [thread:$0]  %s154, 256, %s156, %s143, 128, 64, 4
        $region20: #{tpu_custom_call.1} parent=15 // pred_fallthru
          _
        // Predicated region
        $region21: #{tpu_custom_call.1} parent=15 // pred_check
          %p162 = pneg %p86
        $region22: #{tpu_custom_call.1} parent=15 // pred_check_branch
          %164 = sbr.rel (%p162) target = $region24
        $region23: #{tpu_custom_call.1} parent=15 // pred_region
          %s165 = sand.u32 %s76, 1
          %s166 = scalar_lea.sflag [#allocation7], %s165
          %s167 = sand.u32 %s76, 1
          %s168 = smul.addr %s167, 128
          %s169 = scalar_lea.vmem [#allocation6], %s168
          %s170 = smul.u32 16, %s26
          %s171 = smul.u32 2, %s25
          %s173 = ssub.s32 2048, 2048
          %174 = vsyncadd %s166, %s173
          %s175 = smul.addr %s170, 4
          %s176 = sadd.s32 %s171, %s175
          %s177 = smul.addr %s176, 64
          %s178 = scalar_lea.hbm %s1, %s177
          %s179 = sshll.u32 %s169, 4
          %s180 = int_to_ptr.vmem [resolvable:$true] %s179
          %185 = dma.hbm_to_vmem [thread:$0]  %s178, 2048, %s180, %s166, 256, 128, 8
        $region24: #{tpu_custom_call.1} parent=15 // pred_fallthru
          _
      $region16: #{tpu_custom_call.1} parent=5 // pred_fallthru
        _
      %p186 = scmp.le.s32.totalorder 1, %s17
      %p187 = scmp.lt.s32.totalorder %s17, 5
      %p188 = pnand %p186, %p187
      %p189 = pneg %p188
      // Predicated region
      $region25: #{tpu_custom_call.1} parent=5 // pred_check
        _
      $region26: #{tpu_custom_call.1} parent=5 // pred_check_branch
        %191 = sbr.rel (%p188) target = $region28
      $region27: #{tpu_custom_call.1} parent=5 // pred_region
        %s192 = ssub.s32 %s17, 1
        %s193 = sand.u32 %s51, 1
        %s194 = scalar_lea.sflag [#allocation4], %s193
        %s195 = sand.u32 %s51, 1
        %s196 = smul.addr %s195, 16
        %s197 = scalar_lea.vmem [#allocation3], %s196
        // Predicated region
        $region29: #{tpu_custom_call.1} parent=27 // pred_check
          %p198 = pneg %p64
        $region30: #{tpu_custom_call.1} parent=27 // pred_check_branch
          %200 = sbr.rel (%p198) target = $region32
        $region31: #{tpu_custom_call.1} parent=27 // pred_region
          %201 = dma.done %s194, 256
        $region32: #{tpu_custom_call.1} parent=27 // pred_fallthru
          _
        %s202 = sand.u32 %s79, 1
        %s203 = scalar_lea.sflag [#allocation7], %s202
        %s204 = sand.u32 %s79, 1
        %s205 = smul.addr %s204, 128
        %s206 = scalar_lea.vmem [#allocation6], %s205
        // Predicated region
        $region33: #{tpu_custom_call.1} parent=27 // pred_check
          %p207 = pneg %p92
        $region34: #{tpu_custom_call.1} parent=27 // pred_check_branch
          %209 = sbr.rel (%p207) target = $region36
        $region35: #{tpu_custom_call.1} parent=27 // pred_region
          %210 = dma.done %s203, 2048
        $region36: #{tpu_custom_call.1} parent=27 // pred_fallthru
          _
        %s211 = sand.u32 %s51, 1
        %s212 = scalar_lea.sflag [#allocation4], %s211
        %s213 = sand.u32 %s51, 1
        %s214 = smul.addr %s213, 16
        %s215 = scalar_lea.vmem [#allocation3], %s214
        %p216 = pneg %p64
        %p217 = pneg %p61
        %s218 = sand.u32 %s79, 1
        %s219 = scalar_lea.sflag [#allocation7], %s218
        %s220 = sand.u32 %s79, 1
        %s221 = smul.addr %s220, 128
        %s222 = scalar_lea.vmem [#allocation6], %s221
        %p223 = pneg %p92
        %p224 = pneg %p89
        %p225 = pneg %p120
        %p226 = pneg %p117
        %s227 = sand.u32 %s107, 1
        %s228 = scalar_lea.sflag [#allocation5], %s227
        %s229 = sand.u32 %s107, 1
        %s230 = smul.addr %s229, 32
        %s231 = scalar_lea.vmem [#allocation8], %s230
        %s232 = smul.u32 4, %s27
        %s233 = smul.u32 16, %s29
        %s234 = smul.u32 2, %s28
        %s235 = smul.u32 4, %s27
        %s236 = smul.u32 2, %s28
        %p238 = scmp.eq.s32.totalorder %s29, 0
        // Predicated region
        $region37: #{tpu_custom_call.1} parent=27 // pred_check
          %p239 = pneg %p238
        $region38: #{tpu_custom_call.1} parent=27 // pred_check_branch
          %241 = sbr.rel (%p239) target = $region40
        $region39: #{tpu_custom_call.1} parent=27 // pred_region
          %242 = vst [vmem:[#allocation2] sm:$0xff] 0.0
          %243 = vst [vmem:[#allocation2 + $0x8] sm:$0xff] 0.0
          %244 = vst [vmem:[#allocation2 + $0x10] sm:$0xff] 0.0
          %245 = vst [vmem:[#allocation2 + $0x18] sm:$0xff] 0.0
          %246 = vst [vmem:[#allocation2 + $0x20] sm:$0xff] 0.0
          %247 = vst [vmem:[#allocation2 + $0x28] sm:$0xff] 0.0
          %248 = vst [vmem:[#allocation2 + $0x30] sm:$0xff] 0.0
          %249 = vst [vmem:[#allocation2 + $0x38] sm:$0xff] 0.0
        $region40: #{tpu_custom_call.1} parent=27 // pred_fallthru
          _
        %v250 = vld [vmem:[#allocation2] sm:$0xff]
        %v251 = vld [vmem:[#allocation2 + $0x8] sm:$0xff]
        %v252 = vld [vmem:[#allocation2 + $0x10] sm:$0xff]
        %v253 = vld [vmem:[#allocation2 + $0x18] sm:$0xff]
        %v254 = vld [vmem:[#allocation2 + $0x20] sm:$0xff]
        %v255 = vld [vmem:[#allocation2 + $0x28] sm:$0xff]
        %v256 = vld [vmem:[#allocation2 + $0x30] sm:$0xff]
        %v257 = vld [vmem:[#allocation2 + $0x38] sm:$0xff]
        %v258 = vld [vmem:[%s197] sm:$0xf]
        %v259 = vld [vmem:[%s197 + $0x4] sm:$0xf]
        %v260 = vld [vmem:[%s197 + $0x8] sm:$0xf]
        %v261 = vld [vmem:[%s197 + $0xc] sm:$0xf]
        %v262 = vld [vmem:[%s206] sm:$0xff]
        %v263 = vld [vmem:[%s206 + $0x8] sm:$0xff]
        %v264 = vld [vmem:[%s206 + $0x10] sm:$0xff]
        %v265 = vld [vmem:[%s206 + $0x18] sm:$0xff]
        %v266 = vld [vmem:[%s206 + $0x20] sm:$0xff]
        %v267 = vld [vmem:[%s206 + $0x28] sm:$0xff]
        %v268 = vld [vmem:[%s206 + $0x30] sm:$0xff]
        %v269 = vld [vmem:[%s206 + $0x38] sm:$0xff]
        %v270 = vld [vmem:[%s206 + $0x40] sm:$0xff]
        %v271 = vld [vmem:[%s206 + $0x48] sm:$0xff]
        %v272 = vld [vmem:[%s206 + $0x50] sm:$0xff]
        %v273 = vld [vmem:[%s206 + $0x58] sm:$0xff]
        %v274 = vld [vmem:[%s206 + $0x60] sm:$0xff]
        %v275 = vld [vmem:[%s206 + $0x68] sm:$0xff]
        %v276 = vld [vmem:[%s206 + $0x70] sm:$0xff]
        %v277 = vld [vmem:[%s206 + $0x78] sm:$0xff]
        %v282 = vunpack.c.l.b16 %v258
        %v283 = vunpack.c.l.b16 %v259
        %v284 = vunpack.c.l.b16 %v260
        %v285 = vunpack.c.l.b16 %v261
        %v286 = vpack.c.b16 %v283, %v282
        %v287 = vpack.c.b16 %v285, %v284
        %v306 = vunpack.c.l.b16 %v262
        %v307 = vunpack.c.h.b16 %v262
        %v308 = vunpack.c.l.b16 %v263
        %v309 = vunpack.c.h.b16 %v263
        %v310 = vunpack.c.l.b16 %v264
        %v311 = vunpack.c.h.b16 %v264
        %v312 = vunpack.c.l.b16 %v265
        %v313 = vunpack.c.h.b16 %v265
        %v314 = vunpack.c.l.b16 %v266
        %v315 = vunpack.c.h.b16 %v266
        %v316 = vunpack.c.l.b16 %v267
        %v317 = vunpack.c.h.b16 %v267
        %v318 = vunpack.c.l.b16 %v268
        %v319 = vunpack.c.h.b16 %v268
        %v320 = vunpack.c.l.b16 %v269
        %v321 = vunpack.c.h.b16 %v269
        %v322 = vunpack.c.l.b16 %v270
        %v323 = vunpack.c.h.b16 %v270
        %v324 = vunpack.c.l.b16 %v271
        %v325 = vunpack.c.h.b16 %v271
        %v326 = vunpack.c.l.b16 %v272
        %v327 = vunpack.c.h.b16 %v272
        %v328 = vunpack.c.l.b16 %v273
        %v329 = vunpack.c.h.b16 %v273
        %v330 = vunpack.c.l.b16 %v274
        %v331 = vunpack.c.h.b16 %v274
        %v332 = vunpack.c.l.b16 %v275
        %v333 = vunpack.c.h.b16 %v275
        %v334 = vunpack.c.l.b16 %v276
        %v335 = vunpack.c.h.b16 %v276
        %v336 = vunpack.c.l.b16 %v277
        %v337 = vunpack.c.h.b16 %v277
        %v338 = vpack.c.b16 %v308, %v306
        %v339 = vpack.c.b16 %v309, %v307
        %v340 = vpack.c.b16 %v312, %v310
        %v341 = vpack.c.b16 %v313, %v311
        %v342 = vpack.c.b16 %v316, %v314
        %v343 = vpack.c.b16 %v317, %v315
        %v344 = vpack.c.b16 %v320, %v318
        %v345 = vpack.c.b16 %v321, %v319
        %v346 = vpack.c.b16 %v324, %v322
        %v347 = vpack.c.b16 %v325, %v323
        %v348 = vpack.c.b16 %v328, %v326
        %v349 = vpack.c.b16 %v329, %v327
        %v350 = vpack.c.b16 %v332, %v330
        %v351 = vpack.c.b16 %v333, %v331
        %v352 = vpack.c.b16 %v336, %v334
        %v353 = vpack.c.b16 %v337, %v335
        %370 = vmatprep.subr.bf16.mxu0 %v353
        %371 = vmatpush1.bf16.msra.mxu0 %v352
        %372 = vmatprep.subr.bf16.mxu0 %v351
        %373 = vmatpush1.bf16.msra.mxu0 %v350
        %374 = vmatprep.subr.bf16.mxu0 %v349
        %375 = vmatpush1.bf16.msra.mxu0 %v348
        %376 = vmatprep.subr.bf16.mxu0 %v347
        %377 = vmatpush1.bf16.msra.mxu0 %v346
        %378 = vmatprep.subr.bf16.mxu0 %v345
        %379 = vmatpush1.bf16.msra.mxu0 %v344
        %380 = vmatprep.subr.bf16.mxu0 %v343
        %381 = vmatpush1.bf16.msra.mxu0 %v342
        %382 = vmatprep.subr.bf16.mxu0 %v341
        %383 = vmatpush1.bf16.msra.mxu0 %v340
        %384 = vmatprep.subr.bf16.mxu0 %v339
        %385 = vmatpush1.bf16.msra.mxu0 %v338
        %386 = vmatprep.subr.bf16.mxu0 0
        %387 = vmatpush2.bf16.msra.mxu0 0
        %388 = vmatprep.subr.bf16.mxu0 0
        %389 = vmatpush2.bf16.msra.mxu0 0
        %390 = vmatprep.subr.bf16.mxu0 0
        %391 = vmatpush2.bf16.msra.mxu0 0
        %392 = vmatprep.subr.bf16.mxu0 0
        %393 = vmatpush2.bf16.msra.mxu0 0
        %394 = vmatprep.subr.bf16.mxu0 0
        %395 = vmatpush2.bf16.msra.mxu0 0
        %396 = vmatprep.subr.bf16.mxu0 0
        %397 = vmatpush2.bf16.msra.mxu0 0
        %398 = vmatprep.subr.bf16.mxu0 0
        %399 = vmatpush2.bf16.msra.mxu0 0
        %400 = vmatprep.subr.bf16.mxu0 0
        %401 = vmatpush2.bf16.msra.mxu0 0
        %402 = vmatprep.mubr.bf16.mxu0 0
        %403 = vmatmul.mubr.bf16.gmra.mxu0 %v286
        %v404 = vpop.f32.mrf.mxu0
        %v405 = vadd.f32 0.0, %v404
        %v406 = vpop.f32.mrf.mxu0
        %v407 = vadd.f32 0.0, %v406
        %v408 = vpop.f32.mrf.mxu0
        %v409 = vadd.f32 0.0, %v408
        %v410 = vpop.f32.mrf.mxu0
        %v411 = vadd.f32 0.0, %v410
        %412 = vmatprep.mubr.bf16.mxu0 0
        %413 = vmatmul.mubr.bf16.gmra.mxu0 %v287
        %v414 = vpop.f32.mrf.mxu0
        %v415 = vadd.f32 0.0, %v414
        %v416 = vpop.f32.mrf.mxu0
        %v417 = vadd.f32 0.0, %v416
        %v418 = vpop.f32.mrf.mxu0
        %v419 = vadd.f32 0.0, %v418
        %v420 = vpop.f32.mrf.mxu0
        %v421 = vadd.f32 0.0, %v420
        %422 = vdwg.mxu0
        %v423 = vadd.f32 %v250, %v405
        %v424 = vadd.f32 %v251, %v407
        %v425 = vadd.f32 %v252, %v409
        %v426 = vadd.f32 %v253, %v411
        %v427 = vadd.f32 %v254, %v415
        %v428 = vadd.f32 %v255, %v417
        %v429 = vadd.f32 %v256, %v419
        %v430 = vadd.f32 %v257, %v421
        %431 = vst [vmem:[#allocation2] sm:$0xff] %v423
        %432 = vst [vmem:[#allocation2 + $0x8] sm:$0xff] %v424
        %433 = vst [vmem:[#allocation2 + $0x10] sm:$0xff] %v425
        %434 = vst [vmem:[#allocation2 + $0x18] sm:$0xff] %v426
        %435 = vst [vmem:[#allocation2 + $0x20] sm:$0xff] %v427
        %436 = vst [vmem:[#allocation2 + $0x28] sm:$0xff] %v428
        %437 = vst [vmem:[#allocation2 + $0x30] sm:$0xff] %v429
        %438 = vst [vmem:[#allocation2 + $0x38] sm:$0xff] %v430
        %p439 = scmp.eq.s32.totalorder %s29, 1
        // Predicated region
        $region41: #{tpu_custom_call.1} parent=27 // pred_check
          %p440 = pneg %p439
        $region42: #{tpu_custom_call.1} parent=27 // pred_check_branch
          %442 = sbr.rel (%p440) target = $region44
        $region43: #{tpu_custom_call.1} parent=27 // pred_region
          %v443 = vld [vmem:[#allocation2] sm:$0xff]
          %v444 = vld [vmem:[#allocation2 + $0x8] sm:$0xff]
          %v445 = vld [vmem:[#allocation2 + $0x10] sm:$0xff]
          %v446 = vld [vmem:[#allocation2 + $0x18] sm:$0xff]
          %v447 = vld [vmem:[#allocation2 + $0x20] sm:$0xff]
          %v448 = vld [vmem:[#allocation2 + $0x28] sm:$0xff]
          %v449 = vld [vmem:[#allocation2 + $0x30] sm:$0xff]
          %v450 = vld [vmem:[#allocation2 + $0x38] sm:$0xff]
          %v451 = vpack.c.bf16 %v445, %v443
          %v452 = vpack.c.bf16 %v446, %v444
          %v453 = vpack.c.bf16 %v449, %v447
          %v454 = vpack.c.bf16 %v450, %v448
          %v459 = vunpack.c.l.b16 %v451
          %v460 = vunpack.c.l.b16 %v452
          %v461 = vunpack.c.h.b16 %v451
          %v462 = vunpack.c.h.b16 %v452
          %v463 = vunpack.c.l.b16 %v453
          %v464 = vunpack.c.l.b16 %v454
          %v465 = vunpack.c.h.b16 %v453
          %v466 = vunpack.c.h.b16 %v454
          %v467 = vpack.c.b16 %v460, %v459
          %v468 = vpack.c.b16 %v462, %v461
          %v469 = vpack.c.b16 %v464, %v463
          %v470 = vpack.c.b16 %v466, %v465
          %475 = vst [vmem:[%s231] sm:$0xff] %v467
          %476 = vst [vmem:[%s231 + $0x8] sm:$0xff] %v468
          %477 = vst [vmem:[%s231 + $0x10] sm:$0xff] %v469
          %478 = vst [vmem:[%s231 + $0x18] sm:$0xff] %v470
        $region44: #{tpu_custom_call.1} parent=27 // pred_fallthru
          _
        %s479 = sand.u32 %s107, 1
        %s480 = scalar_lea.sflag [#allocation5], %s479
        %s481 = sand.u32 %s107, 1
        %s482 = smul.addr %s481, 32
        %s483 = scalar_lea.vmem [#allocation8], %s482
        // Predicated region
        $region45: #{tpu_custom_call.1} parent=27 // pred_check
          %p484 = pneg %p117
        $region46: #{tpu_custom_call.1} parent=27 // pred_check_branch
          %486 = sbr.rel (%p484) target = $region48
        $region47: #{tpu_custom_call.1} parent=27 // pred_region
          %s487 = smul.u32 4, %s27
          %s488 = smul.u32 2, %s28
          %s490 = ssub.s32 512, 512
          %491 = vsyncadd %s480, %s490
          %s492 = smul.addr %s487, 4
          %s493 = sadd.s32 %s488, %s492
          %s494 = smul.addr %s493, 64
          %s495 = scalar_lea.hbm %s2, %s494
          %s496 = sshll.u32 %s483, 4
          %s497 = int_to_ptr.vmem [resolvable:$true] %s496
          %502 = dma.vmem_to_hbm [thread:$0]  %s497, 512, %s495, %s480, 128, 256, 8
        $region48: #{tpu_custom_call.1} parent=27 // pred_fallthru
          _
      $region28: #{tpu_custom_call.1} parent=5 // pred_fallthru
        _
      %p503 = scmp.le.s32.totalorder 2, %s17
      // Predicated region
      $region49: #{tpu_custom_call.1} parent=5 // pred_check
        %p504 = pneg %p503
      $region50: #{tpu_custom_call.1} parent=5 // pred_check_branch
        %506 = sbr.rel (%p504) target = $region52
      $region51: #{tpu_custom_call.1} parent=5 // pred_region
        %s507 = ssub.s32 %s17, 2
        // Predicated region
        $region53: #{tpu_custom_call.1} parent=51 // pred_check
          %p508 = pneg %p123
        $region54: #{tpu_custom_call.1} parent=51 // pred_check_branch
          %510 = sbr.rel (%p508) target = $region56
        $region55: #{tpu_custom_call.1} parent=51 // pred_region
          %s511 = sand.u32 %s108, 1
          %s512 = scalar_lea.sflag [#allocation5], %s511
          %s513 = sand.u32 %s108, 1
          %s514 = smul.addr %s513, 32
          %s515 = scalar_lea.vmem [#allocation8], %s514
          %516 = dma.done %s512, 512
        $region56: #{tpu_custom_call.1} parent=51 // pred_fallthru
          _
      $region52: #{tpu_custom_call.1} parent=5 // pred_fallthru
        _
    $region6: #{tpu_custom_call.1} parent=1 // loop_footer
      %s21 = sadd.s32 1, %s17
    $region7: #{tpu_custom_call.1} parent=1 // loop_footer_branch
      %16 = sbr.rel target = $region3
    $region8: #{tpu_custom_call.1} parent=1 // loop_exit
      _
    %517 = vsyncpa [#allocation4], 1
    %s518 = scalar_lea.sflag [#allocation4], 1
    %519 = vsyncpa %s518, 1
    %520 = vsyncpa [#allocation7], 1
    %s521 = scalar_lea.sflag [#allocation7], 1
    %522 = vsyncpa %s521, 1
    %523 = vsyncpa [#allocation5], 1
    %s524 = scalar_lea.sflag [#allocation5], 1
    %525 = vsyncpa %s524, 1

</llo_original>
